<compile_context>
chip_gen: v7x
topology: tpu7x:2x2x1
jax: 0.10.0
libtpu: 0.0.40
codegen_flags: <defaults>
</compile_context>

<pallas_src>
import jax
import jax.numpy as jnp
from jax.experimental import pallas as pl
from jax.experimental.pallas import tpu as pltpu


def _hbm_copy_kernel(z_hbm_ref, o_hbm_ref, sem):
    # One direct HBM->HBM DMA for the whole array: no grid, no VMEM staging.
    cp = pltpu.make_async_copy(z_hbm_ref, o_hbm_ref, sem)
    cp.start()
    cp.wait()


def person_net_forward(z, *, copy=True):
    """Pallas equivalent of PersonNet.forward.

    copy=False : literal `.to(device)` semantics on an already-resident array
                 -> return z unchanged (zero HBM traffic).
    copy=True  : materialize a fresh device buffer with a single direct
                 HBM->HBM DMA (roofline-bound on every TPU generation).
    """
    if not copy:
        return z

    return pl.pallas_call(
        _hbm_copy_kernel,
        out_shape=jax.ShapeDtypeStruct(z.shape, z.dtype),
        in_specs=[pl.BlockSpec(memory_space=pl.ANY)],
        out_specs=pl.BlockSpec(memory_space=pl.ANY),
        scratch_shapes=[pltpu.SemaphoreType.DMA(())],
    )(z)


class PersonNet:
    """JAX/Pallas port of the PyTorch PersonNet module."""

    def __init__(self, z):
        # In the original module, z = load_data(z_csv_path).  Here z is a
        # deterministic in-memory array (synthetic "CSV" contents).
        self.z = z

    def forward(self):
        # PyTorch: return self.z.to(device)  ->  direct HBM->HBM DMA copy.
        # (person_net_forward(self.z, copy=False) is the literal no-op path.)
        return person_net_forward(self.z)


if __name__ == "__main__":
    key = jax.random.PRNGKey(0)

    # Small "CSV table": 16 rows x 128 feature columns, float32.
    z = jax.random.normal(key, (16, 128), dtype=jnp.float32)
    net = PersonNet(z)
    out = jax.block_until_ready(net.forward())
    assert out.shape == z.shape and out.dtype == z.dtype
    assert bool(jnp.allclose(out, z)), "forward() must return z unchanged"

    # Narrow-column CSV-like table (cols not a multiple of 128): the direct
    # HBM->HBM DMA path has no (8,128) / lane-density constraints, so no
    # reshaping or masked partial stores are involved.
    z2 = jax.random.normal(jax.random.PRNGKey(0), (64, 9), dtype=jnp.float32)
    out2 = jax.block_until_ready(person_net_forward(z2))
    assert out2.shape == z2.shape and out2.dtype == z2.dtype
    assert bool(jnp.allclose(out2, z2)), "HBM->HBM copy must return z unchanged"

    # Zero-copy path: literal `.to(device)` on an already-resident array.
    out3 = person_net_forward(z, copy=False)
    assert out3 is z

    print("KERNEL_OK")
</pallas_src>

<mosaic_0001>
module attributes {stable_mosaic.version = 11 : i64} {
  func.func @_hbm_copy_kernel(%arg0: memref<16x128xf32, #tpu.memory_space<any>>, %arg1: memref<16x128xf32, #tpu.memory_space<any>>, %arg2: memref<!tpu.dma_semaphore, #tpu.memory_space<semaphore_mem>>) attributes {dimension_semantics = [], scalar_prefetch = 0 : i64, scratch_operands = 1 : i64, tpu.core_type = #tpu.core_type<tc>} {
    tpu.enqueue_dma source(%arg0 : memref<16x128xf32, #tpu.memory_space<any>>) target(%arg1 : memref<16x128xf32, #tpu.memory_space<any>>) target_semaphore(%arg2 : memref<!tpu.dma_semaphore, #tpu.memory_space<semaphore_mem>>)
    tpu.wait_dma2 semaphore(%arg2 : memref<!tpu.dma_semaphore, #tpu.memory_space<semaphore_mem>>) src(%arg0 : memref<16x128xf32, #tpu.memory_space<any>>) dst(%arg1 : memref<16x128xf32, #tpu.memory_space<any>>)
    return
  }
}

</mosaic_0001>

<llo_original>
// kernel: tpu_custom_call.1
$region0: #{tpu_custom_call.1}
  #allocation0 [shape = 'u32[]', space=smem, size = 0x4, offset = 0x4, fixed_abs, tag = 'smem constant byte address 0x4 - core index']
  #allocation1 [shape = 'u32[144,128]{1,0:T(1,128)}', space=vmem, size = 0x12000, scoped, tag = 'internal scratch']
  #allocation2 [shape = 's32[1]{0}', space=sflag, size = 0x4, scoped, tag = 'scratch operand']
  #allocation3 [shape = 's32[]', space=sflag, size = 0x4, offset = 0, fixed_abs, tag = 'sflag constant byte address 0x0 - dummy sync flag']
  #allocation4 [shape = 'u32[0]{0}', space=smem, size = 0, offset = 0, fixed_abs, tag = 'smem constant byte address 0x0 - null']
  %s0 = inlined_call_operand.hbm [shape: f32[16,128], index: 0, kind: input, shape index: {}]
  %s1 = inlined_call_operand.hbm [shape: f32[16,128], index: 1, kind: output, shape index: {}]
  %s2 = sld [smem:[#allocation0]]
  $region2: #{tpu_custom_call.1} parent=0
    _
  %s4 = ssub.s32 1, %s2
  %s5 = scalar_select 0, %s4, %s2
  %s7 = sshll.u32 1, 14
  %s8 = sxor.u32 4294967295, %s7
  %s11 = sshll.u32 3, 24
  %s12 = sxor.u32 4294967295, %s11
  %s13 = sand.u32 0, %s12
  %s15 = sor.u32 %s13, 0
  %18 = dma.general %s0, 256, %s1, [#allocation2], [#allocation3], [#allocation4], %s15, 0
  %s19 = smul.u32 16, 1
  %s20 = sshll.u32 %s19, 4
  %21 = dma.done [#allocation2], %s20
  %22 = vsyncmov [#allocation2]
  %s23 = vpop.sfrf %22
  %p24 = scmp.eq.s32.totalorder %s23, 0
  %p25 = pneg %p24
  %27 = shalt.err (%p25)

</llo_original>
